<compile_context>
chip_gen: v6e
topology: v6e:2x2x1
jax: 0.10.0
libtpu: 0.0.40
codegen_flags: <defaults>
</compile_context>

<pallas_src>
import math

import jax
import jax.numpy as jnp
from jax.experimental import pallas as pl
from jax.experimental.pallas import tpu as pltpu


# ~2 MiB per block: with double-buffered input + output (4 live block buffers) this fits
# comfortably inside v5e's 16 MiB scoped-VMEM default and leaves headroom on v7x's
# smaller VMEM (64 MiB total / 32 MiB scoped), while being large enough (>=1 MiB) to
# reach ~85% of HBM roofline per the measured tile-size sweep.
_TARGET_BLOCK_BYTES = 2 * 1024 * 1024


def _layer_scale_kernel(x_ref, gamma_ref, o_ref):
    # x_ref: (row_tile, L); gamma_ref: (1, L) -> broadcasts over rows.
    o_ref[...] = x_ref[...] * gamma_ref[...]


def _row_alignment(dtype):
    """Sublane packing alignment for the row tile (8 for f32, 16 for bf16, 32 for int8/fp8)."""
    itemsize = jnp.dtype(dtype).itemsize
    if itemsize <= 1:
        return 32
    if itemsize == 2:
        return 16
    return 8


def _choose_row_tile(rows, row_bytes, align):
    """Largest aligned row tile whose block lands near _TARGET_BLOCK_BYTES."""
    cap = max(align, (_TARGET_BLOCK_BYTES // row_bytes) // align * align)
    if rows <= cap:
        return ((rows + align - 1) // align) * align  # single (padded) block
    return cap


def layer_scale(x, gamma):
    """LayerScale forward: x * gamma, gamma of shape (dim,), broadcast over the last axis."""
    orig_shape = x.shape
    D = orig_shape[-1]
    dtype = x.dtype
    gamma = gamma.astype(dtype)

    rows = 1
    for s in orig_shape[:-1]:
        rows *= s

    # Lane-dense repack: if D is not a multiple of 128, fold several logical rows into
    # one lcm(D,128)-wide row and tile gamma to match, so every store is unmasked.
    L = D
    gamma_row = gamma
    if D % 128 != 0:
        lane_width = D * 128 // math.gcd(D, 128)  # lcm(D, 128), a multiple of 128
        repeat = lane_width // D
        if rows % repeat == 0:
            L = lane_width
            rows = rows // repeat
            gamma_row = jnp.tile(gamma, repeat)
        # else: fall back to (rows, D); last block dim == full array dim is legal
        # but stores are lane-masked.
        # TODO(synk): pad the channel dim for the ragged D / ragged rows case.

    itemsize = jnp.dtype(dtype).itemsize
    row_bytes = L * itemsize
    align = _row_alignment(dtype)
    row_tile = _choose_row_tile(rows, row_bytes, align)
    padded_rows = ((rows + row_tile - 1) // row_tile) * row_tile

    x2 = x.reshape(rows, L)
    if padded_rows != rows:
        # Pad rows (instead of one giant all-rows block) so pipelining stays 2-deep
        # and the VMEM footprint stays bounded for any B*N.
        x2 = jnp.pad(x2, ((0, padded_rows - rows), (0, 0)))
    gamma2 = gamma_row.reshape(1, L)

    grid = padded_rows // row_tile
    out = pl.pallas_call(
        _layer_scale_kernel,
        out_shape=jax.ShapeDtypeStruct((padded_rows, L), dtype),
        grid_spec=pltpu.PrefetchScalarGridSpec(
            num_scalar_prefetch=0,
            grid=(grid,),
            in_specs=[
                pl.BlockSpec((row_tile, L), lambda i: (i, 0)),
                # Constant-index block: gamma stays resident in VMEM across the grid.
                pl.BlockSpec((1, L), lambda i: (0, 0)),
            ],
            out_specs=pl.BlockSpec((row_tile, L), lambda i: (i, 0)),
        ),
        compiler_params=pltpu.CompilerParams(
            # "parallel" lets v7x shard the row axis across its 2 TensorCores;
            # neutral on v5e/v6e.
            dimension_semantics=("parallel",),
        ),
        cost_estimate=pl.CostEstimate(
            flops=padded_rows * L,
            transcendentals=0,
            bytes_accessed=2 * padded_rows * L * itemsize,
        ),
    )(x2, gamma2)

    if padded_rows != rows:
        out = out[:rows]
    return out.reshape(orig_shape)


if __name__ == "__main__":
    key = jax.random.PRNGKey(0)
    B, N, D = 2, 8, 32
    init_values = 1e-5

    x = jax.random.normal(key, (B, N, D), dtype=jnp.float32)
    # nn.Parameter(init_values * torch.ones(dim)) — deterministic init.
    gamma = init_values * jnp.ones((D,), dtype=jnp.float32)

    y = layer_scale(x, gamma)
    y = jax.block_until_ready(y)

    # Reference check against plain JAX broadcast multiply.
    y_ref = x * gamma
    assert jnp.allclose(y, y_ref, atol=1e-6, rtol=1e-6), "mismatch vs reference"

    print("KERNEL_OK")
</pallas_src>

<mosaic_0001>
module attributes {stable_mosaic.version = 11 : i64} {
  func.func @_layer_scale_kernel(%arg0: i32, %arg1: memref<8x128xf32, #tpu.memory_space<vmem>>, %arg2: memref<1x128xf32, #tpu.memory_space<vmem>>, %arg3: memref<8x128xf32, #tpu.memory_space<vmem>>) attributes {dimension_semantics = [#tpu.dimension_semantics<parallel>], iteration_bounds = array<i64: 1>, scalar_prefetch = 0 : i64, scratch_operands = 0 : i64, tpu.core_type = #tpu.core_type<tc>, window_params = [{transform_indices = @transform_0, window_bounds = array<i64: 8, 128>}, {pipeline_mode = #tpu.pipeline_mode<synchronous>, transform_indices = @transform_1, window_bounds = array<i64: 1, 128>}, {transform_indices = @transform_2, window_bounds = array<i64: 8, 128>}]} {
    %c0 = arith.constant 0 : index
    %c0_0 = arith.constant 0 : index
    %0 = vector.load %arg1[%c0, %c0_0] : memref<8x128xf32, #tpu.memory_space<vmem>>, vector<8x128xf32>
    %c0_1 = arith.constant 0 : index
    %c0_2 = arith.constant 0 : index
    %1 = vector.load %arg2[%c0_1, %c0_2] : memref<1x128xf32, #tpu.memory_space<vmem>>, vector<1x128xf32>
    %2 = vector.broadcast %1 : vector<1x128xf32> to vector<8x128xf32>
    %3 = arith.mulf %0, %2 : vector<8x128xf32>
    %c0_3 = arith.constant 0 : index
    %c0_4 = arith.constant 0 : index
    %4 = vector.load %arg3[%c0_3, %c0_4] : memref<8x128xf32, #tpu.memory_space<vmem>>, vector<8x128xf32>
    tpu.vector_store %arg3[%c0_3, %c0_4], %3 {strides = array<i32>} : memref<8x128xf32, #tpu.memory_space<vmem>>, vector<8x128xf32>,
    return
  }
  func.func @transform_0(%arg0: i32) -> (i32, i32) {
    %c0_i32 = arith.constant 0 : i32
    %c0_i32_0 = arith.constant 0 : i32
    return %arg0, %c0_i32 : i32, i32
  }
  func.func @transform_1(%arg0: i32) -> (i32, i32) {
    %c0_i32 = arith.constant 0 : i32
    %c0_i32_0 = arith.constant 0 : i32
    %c0_i32_1 = arith.constant 0 : i32
    return %c0_i32, %c0_i32_0 : i32, i32
  }
  func.func @transform_2(%arg0: i32) -> (i32, i32) {
    %c0_i32 = arith.constant 0 : i32
    %c0_i32_0 = arith.constant 0 : i32
    return %arg0, %c0_i32 : i32, i32
  }
}

</mosaic_0001>

<llo_original>
// kernel: tpu_custom_call.1
$region0: #{tpu_custom_call.1}
  #allocation0 [shape = 'u32[]', space=smem, size = 0x4, offset = 0x4, fixed_abs, tag = 'smem constant byte address 0x4 - core index']
  #allocation1 [shape = 'u32[144,128]{1,0:T(1,128)}', space=vmem, size = 0x12000, scoped, tag = 'internal scratch']
  %s0 = inlined_call_operand.hbm [shape: f32[8,128], index: 0, kind: input, shape index: {}]
  %s1 = inlined_call_operand.vmem [shape: f32[1,128], index: 1, kind: input, shape index: {}]
  %s2 = inlined_call_operand.hbm [shape: f32[8,128], index: 2, kind: output, shape index: {}]
  %s3 = sld [smem:[#allocation0]]
  $region22: #{tpu_custom_call.1} parent=0
    _
  %s5 = ssub.s32 1, %s3
  %s6 = scalar_select 0, %s5, %s3
  $region1: #{tpu_custom_call.1} parent=0
    #allocation2 [shape = 'u8[4096]{0}', space=vmem, size = 0x1000, scoped, tag = 'input window, operand 0, single buffered']
    #allocation3 [shape = 's32[1]{0}', space=sflag, size = 0x4, scoped, tag = 'scoped memory for tpu_custom_call.1']
    #allocation4 [shape = 's32[1]{0}', space=sflag, size = 0x4, scoped, tag = 'scoped memory for tpu_custom_call.1']
    #allocation5 [shape = 'u8[4096]{0}', space=vmem, size = 0x1000, scoped, tag = 'output window, operand 0, single buffered']
    %7 = vsyncpa [#allocation3], 0
    %8 = vsyncpa [#allocation4], 0
    // Predicated region
    $region2: #{tpu_custom_call.1} parent=1 // pred_check
      _
    $region3: #{tpu_custom_call.1} parent=1 // pred_check_branch
      %10 = sbr.rel (0) target = $region5
    $region4: #{tpu_custom_call.1} parent=1 // pred_region
      %s12 = ssub.s32 128, 128
      %13 = vsyncadd [#allocation3], %s12
      %s15 = sshll.u32 [#allocation2], 4
      %s16 = int_to_ptr.vmem [resolvable:$true] %s15
      %18 = dma.hbm_to_vmem [thread:$0]  %s0, 128, %s16, [#allocation3]
    $region5: #{tpu_custom_call.1} parent=1 // pred_fallthru
      _
    // Predicated region
    $region6: #{tpu_custom_call.1} parent=1 // pred_check
      _
    $region7: #{tpu_custom_call.1} parent=1 // pred_check_branch
      %20 = sbr.rel (0) target = $region9
    $region8: #{tpu_custom_call.1} parent=1 // pred_region
      _
    $region9: #{tpu_custom_call.1} parent=1 // pred_fallthru
      _
    // Predicated region
    $region10: #{tpu_custom_call.1} parent=1 // pred_check
      _
    $region11: #{tpu_custom_call.1} parent=1 // pred_check_branch
      %22 = sbr.rel (0) target = $region13
    $region12: #{tpu_custom_call.1} parent=1 // pred_region
      %23 = dma.done [#allocation3], 128
    $region13: #{tpu_custom_call.1} parent=1 // pred_fallthru
      _
    %v24 = vld [vmem:[#allocation2] sm:$0xff]
    %v25 = vld [vmem:[%s1] sm:$0x1]
    %v27 = vlaneseq
    %v28 = vshrl.u32 %v27, 7
    %v29 = vsub.s32 0, %v28
    %v30 = vrot.slane %v25, %v29
    %v32 = vmul.f32 %v24, %v30
    %33 = vst [vmem:[#allocation5] sm:$0xff] %v32
    // Predicated region
    $region14: #{tpu_custom_call.1} parent=1 // pred_check
      _
    $region15: #{tpu_custom_call.1} parent=1 // pred_check_branch
      %35 = sbr.rel (0) target = $region17
    $region16: #{tpu_custom_call.1} parent=1 // pred_region
      %s37 = ssub.s32 128, 128
      %38 = vsyncadd [#allocation4], %s37
      %s40 = sshll.u32 [#allocation5], 4
      %s41 = int_to_ptr.vmem [resolvable:$true] %s40
      %43 = dma.vmem_to_hbm [thread:$0]  %s41, 128, %s2, [#allocation4]
    $region17: #{tpu_custom_call.1} parent=1 // pred_fallthru
      _
    // Predicated region
    $region18: #{tpu_custom_call.1} parent=1 // pred_check
      _
    $region19: #{tpu_custom_call.1} parent=1 // pred_check_branch
      %45 = sbr.rel (0) target = $region21
    $region20: #{tpu_custom_call.1} parent=1 // pred_region
      %46 = dma.done [#allocation4], 128
    $region21: #{tpu_custom_call.1} parent=1 // pred_fallthru
      _
    %47 = vsyncpa [#allocation3], 1
    %48 = vsyncpa [#allocation4], 1

</llo_original>
